<compile_context>
chip_gen: v5e
topology: v5e:2x2
jax: 0.10.0
libtpu: 0.0.40
codegen_flags: <defaults>
</compile_context>

<pallas_src>
import functools

import jax
import jax.numpy as jnp
from jax.experimental import pallas as pl
from jax.experimental.pallas import tpu as pltpu


# ---------------------------------------------------------------------------
# Pool kernels:  x2[B*C, H*W] -> pooled[B*C, 1] (f32)
# ---------------------------------------------------------------------------
def _pool_kernel_single(x_ref, o_ref, *, inv_hw):
    # Whole reduction axis fits in one block: reduce and store directly.
    x = x_ref[...].astype(jnp.float32)
    o_ref[...] = jnp.sum(x, axis=1, keepdims=True) * inv_hw


def _pool_kernel_multi(x_ref, o_ref, acc_ref, *, inv_hw, lane_groups):
    j = pl.program_id(1)

    @pl.when(j == 0)
    def _():
        acc_ref[...] = jnp.zeros_like(acc_ref)

    # Inner loop: VPU adds of 128-lane column groups into a (tr, 128) f32
    # accumulator.  No cross-lane reduction, no masked (tr, 1) RMW per step.
    x = x_ref[...].astype(jnp.float32)
    s = x[:, 0:128]
    for g in range(1, lane_groups):
        s = s + x[:, g * 128:(g + 1) * 128]
    acc_ref[...] += s

    @pl.when(j == pl.num_programs(1) - 1)
    def _():
        # Single cross-lane reduction + scale in the epilogue only.
        o_ref[...] = jnp.sum(acc_ref[...], axis=1, keepdims=True) * inv_hw


# ---------------------------------------------------------------------------
# Tile selection: byte-budget driven, VMEM-capacity aware.
# ---------------------------------------------------------------------------
def _round_down(x, m):
    return (x // m) * m


def _divisor_tile(dim, unit, target):
    """Largest multiple of `unit` that divides `dim` and is <= max(target, unit).
    Falls back to the full dim (block dim == array dim is always legal)."""
    if dim <= unit or dim % unit != 0:
        return dim
    t = min(dim, max(unit, _round_down(target, unit)))
    while t > unit and dim % t != 0:
        t -= unit
    return t


def _pool_tiles(R, L, itemsize):
    pack = max(8, 32 // itemsize)          # preferred row multiple: 8 f32 / 16 bf16 / 32 int8
    try:
        vmem_cap = int(pltpu.get_tpu_info().vmem_capacity_bytes)
    except Exception:
        vmem_cap = 64 << 20                # conservative (v7x-class) fallback
    # ~4-8 MiB blocks: measured HBM-roofline returns flatten beyond that, and
    # 2x double-buffered blocks must stay well inside scoped VMEM (v7x: 64 MiB).
    target = min(8 << 20, max(1 << 20, vmem_cap // 8))

    # Lane (reduction) tile: full L unless a single `pack`-row slab already
    # exceeds the budget (essentially never for SE spatial sizes).
    if L * itemsize * pack > target and L % 128 == 0:
        tl_target = max(128, min(8192, _round_down(target // (pack * itemsize), 128)))
        tl = _divisor_tile(L, 128, tl_target)
    else:
        tl = L

    # Row tile from the remaining byte budget; keep >= 2 row blocks so a
    # 2-TensorCore chip (v7x) can split the "parallel" row axis across cores.
    want = max(pack, _round_down(target // max(tl * itemsize, 1), pack))
    if R >= 2 * pack:
        want = min(want, max(pack, _round_down(R // 2, pack)))
    tr = _divisor_tile(R, 8, want)

    # Safety clamp (robustness): if the full-dim fallback produced an oversized
    # block, try to shrink the lane tile instead of risking a VMEM OOM.
    hard_cap = vmem_cap // 4
    if tr * tl * itemsize > hard_cap and L % 128 == 0 and L > 128:
        tl = _divisor_tile(L, 128, max(128, _round_down(hard_cap // (tr * itemsize), 128)))

    return tr, tl, vmem_cap


def global_avg_pool(x2):
    """Mean over the last axis of a [R, L] array, computed with a Pallas kernel."""
    R, L = x2.shape
    itemsize = x2.dtype.itemsize
    tr, tl, vmem_cap = _pool_tiles(R, L, itemsize)
    grid = (pl.cdiv(R, tr), pl.cdiv(L, tl))
    multi = grid[1] > 1

    if multi:
        kernel = functools.partial(_pool_kernel_multi,
                                   inv_hw=float(1.0 / L),
                                   lane_groups=tl // 128)
        scratch = [pltpu.VMEM((tr, 128), jnp.float32)]
    else:
        kernel = functools.partial(_pool_kernel_single, inv_hw=float(1.0 / L))
        scratch = []

    # Explicit VMEM budget: 2x double-buffered input block + output/accumulator
    # (+ margin).  Raising this matters on v5e (16 MiB scoped default).
    block_bytes = tr * tl * itemsize
    out_bytes = tr * 128 * 4                       # (tr, 1) out block, lanes pad to 128
    acc_bytes = tr * 128 * 4 if multi else 0
    need = 2 * block_bytes + 2 * out_bytes + acc_bytes + (2 << 20)
    vmem_limit = int(min(max(need, 32 << 20), vmem_cap))

    cost = pl.CostEstimate(flops=int(R) * int(L),
                           transcendentals=0,
                           bytes_accessed=int(R) * int(L) * itemsize + int(R) * 4)

    # NOTE: on v7x, pltpu.CORE_PARALLEL on axis 0 (or pl.Buffered(3) on the
    # input spec when blocks stay <1 MiB) are further options; kept on the
    # conservative "parallel"/double-buffer path here.
    return pl.pallas_call(
        kernel,
        out_shape=jax.ShapeDtypeStruct((R, 1), jnp.float32),
        grid_spec=pltpu.PrefetchScalarGridSpec(
            num_scalar_prefetch=0,
            grid=grid,
            in_specs=[pl.BlockSpec((tr, tl), lambda i, j: (i, j))],
            out_specs=pl.BlockSpec((tr, 1), lambda i, j: (i, 0)),
            scratch_shapes=scratch,
        ),
        compiler_params=pltpu.CompilerParams(
            dimension_semantics=("parallel", "arbitrary"),
            vmem_limit_bytes=vmem_limit,
        ),
        cost_estimate=cost,
    )(x2)


# ---------------------------------------------------------------------------
# SE.forward
# ---------------------------------------------------------------------------
def se_forward(x, w1, b1, w2, b2):
    """x: [B, C, H, W]; w1: [hidden, C(,1,1)]; b1: [hidden]; w2: [Cout, hidden(,1,1)]; b2: [Cout]."""
    B, C, H, W = x.shape
    hidden = w1.shape[0]
    cout = w2.shape[0]

    # Lane-dense slab via a free contiguous reshape (no pad / slice ops).
    x2 = x.reshape(B * C, H * W)
    pooled = global_avg_pool(x2).reshape(B, C)            # tiny [B, C] f32

    # SE head: two tiny channel matmuls + swish + sigmoid on a few-KB tensor.
    # Plain jnp (XLA fuses it) — a dedicated pallas_call's dispatch/pipeline
    # prologue cost would rival the head's compute (per perf review).
    w1t = w1.reshape(hidden, C).T.astype(jnp.float32)      # [C, hidden]
    w2t = w2.reshape(cout, hidden).T.astype(jnp.float32)   # [hidden, Cout]
    h = jnp.dot(pooled, w1t, preferred_element_type=jnp.float32) + b1.astype(jnp.float32)
    h = h * jax.nn.sigmoid(h)                              # MemoryEfficientSwish forward
    o = jnp.dot(h, w2t, preferred_element_type=jnp.float32) + b2.astype(jnp.float32)
    out = jax.nn.sigmoid(o).astype(x.dtype)                # [B, Cout]
    return out.reshape(B, cout, 1, 1)


if __name__ == "__main__":
    key = jax.random.PRNGKey(0)
    k0, k1, k2, k3, k4 = jax.random.split(key, 5)

    B, C, H, W = 2, 4, 16, 16
    reduce_factor = 2
    cout = 4
    hidden = C // reduce_factor

    x = jax.random.normal(k0, (B, C, H, W), dtype=jnp.float32)       # NCHW
    w1 = jax.random.normal(k1, (hidden, C), dtype=jnp.float32) * 0.5
    b1 = jax.random.normal(k2, (hidden,), dtype=jnp.float32) * 0.1
    w2 = jax.random.normal(k3, (cout, hidden), dtype=jnp.float32) * 0.5
    b2 = jax.random.normal(k4, (cout,), dtype=jnp.float32) * 0.1

    se = jax.jit(se_forward)
    y = se(x, w1, b1, w2, b2)
    jax.block_until_ready(y)

    # Pure-JAX reference of SE.forward (same precision settings).
    pooled_ref = jnp.mean(x.astype(jnp.float32), axis=(2, 3))        # [B, C]
    h_ref = jnp.dot(pooled_ref, w1.T, preferred_element_type=jnp.float32) + b1
    h_ref = h_ref * jax.nn.sigmoid(h_ref)
    o_ref = jnp.dot(h_ref, w2.T, preferred_element_type=jnp.float32) + b2
    y_ref = jax.nn.sigmoid(o_ref).reshape(B, cout, 1, 1).astype(x.dtype)

    assert y.shape == (B, cout, 1, 1) and y.dtype == x.dtype
    assert jnp.allclose(y, y_ref, atol=1e-4, rtol=1e-4), "mismatch vs reference"

    print("KERNEL_OK")
</pallas_src>

<mosaic_0001>
module attributes {stable_mosaic.version = 11 : i64} {
  func.func @_pool_kernel_single(%arg0: i32, %arg1: i32, %arg2: memref<8x256xf32, #tpu.memory_space<vmem>>, %arg3: memref<8x1xf32, #tpu.memory_space<vmem>>) attributes {dimension_semantics = [#tpu.dimension_semantics<parallel>, #tpu.dimension_semantics<arbitrary>], iteration_bounds = array<i64: 1, 1>, scalar_prefetch = 0 : i64, scratch_operands = 0 : i64, tpu.core_type = #tpu.core_type<tc>, window_params = [{transform_indices = @transform_0, window_bounds = array<i64: 8, 256>}, {transform_indices = @transform_1, window_bounds = array<i64: 8, 1>}]} {
    %c0 = arith.constant 0 : index
    %c0_0 = arith.constant 0 : index
    %0 = vector.load %arg2[%c0, %c0_0] : memref<8x256xf32, #tpu.memory_space<vmem>>, vector<8x256xf32>
    %cst = arith.constant dense<0.000000e+00> : vector<8xf32>
    %1 = vector.multi_reduction <add>, %0, %cst [1] : vector<8x256xf32> to vector<8xf32>
    %2 = vector.shape_cast %1 : vector<8xf32> to vector<8x1xf32>
    %cst_1 = arith.constant 3.906250e-03 : f32
    %3 = vector.broadcast %cst_1 : f32 to vector<8x1xf32>
    %4 = arith.mulf %2, %3 : vector<8x1xf32>
    %c0_2 = arith.constant 0 : index
    %c0_3 = arith.constant 0 : index
    %5 = vector.load %arg3[%c0_2, %c0_3] : memref<8x1xf32, #tpu.memory_space<vmem>>, vector<8x1xf32>
    tpu.vector_store %arg3[%c0_2, %c0_3], %4 {strides = array<i32>} : memref<8x1xf32, #tpu.memory_space<vmem>>, vector<8x1xf32>,
    return
  }
  func.func @transform_0(%arg0: i32, %arg1: i32) -> (i32, i32) {
    %c0_i32 = arith.constant 0 : i32
    return %arg0, %arg1 : i32, i32
  }
  func.func @transform_1(%arg0: i32, %arg1: i32) -> (i32, i32) {
    %c0_i32 = arith.constant 0 : i32
    %c0_i32_0 = arith.constant 0 : i32
    return %arg0, %c0_i32 : i32, i32
  }
}

</mosaic_0001>

<llo_original>
// kernel: se_forward.1
$region0: #{se_forward.1}
  #allocation0 [shape = 'u32[]', space=smem, size = 0x4, offset = 0x4, fixed_abs, tag = 'smem constant byte address 0x4 - core index']
  #allocation1 [shape = 'u32[72,128]{1,0:T(1,128)}', space=vmem, size = 0x9000, scoped, tag = 'internal scratch']
  %s0 = inlined_call_operand.vmem [shape: f32[8,256], index: 0, kind: input, shape index: {}]
  %s1 = inlined_call_operand.vmem [shape: f32[8,1], index: 1, kind: output, shape index: {}]
  %s2 = sld [smem:[#allocation0]]
  $region14: #{se_forward.1} parent=0
    _
  %s4 = ssub.s32 1, %s2
  %s5 = scalar_select 0, %s4, %s2
  // Predicated region
  $region2: #{se_forward.1} parent=0 // pred_check
    _
  $region3: #{se_forward.1} parent=0 // pred_check_branch
    %7 = sbr.rel (0) target = $region5
  $region4: #{se_forward.1} parent=0 // pred_region
    _
  $region5: #{se_forward.1} parent=0 // pred_fallthru
    _
  %v8 = vld [vmem:[%s0] sm:$0xff]
  %v9 = vld [vmem:[%s0 + $0x8] sm:$0xff]
  %v10 = vadd.f32 %v8, %v9
  %11 = vadd.xlane.f32.xlu0 %v10
  %v12 = vpop.xlane.xlu0 %11
  %v13 = vmul.f32 %v12, 0.00390625
  %vm14 = vcmask 7168
  %15 = vst.msk [vmem:[%s1] sm:$0xff] %vm14, %v13
  // Predicated region
  $region6: #{se_forward.1} parent=0 // pred_check
    _
  $region7: #{se_forward.1} parent=0 // pred_check_branch
    %17 = sbr.rel (0) target = $region9
  $region8: #{se_forward.1} parent=0 // pred_region
    _
  $region9: #{se_forward.1} parent=0 // pred_fallthru
    _
  // Predicated region
  $region10: #{se_forward.1} parent=0 // pred_check
    _
  $region11: #{se_forward.1} parent=0 // pred_check_branch
    %19 = sbr.rel (0) target = $region13
  $region12: #{se_forward.1} parent=0 // pred_region
    _
  $region13: #{se_forward.1} parent=0 // pred_fallthru
    _

</llo_original>
